<compile_context>
chip_gen: v5e
topology: v5e:2x2
jax: 0.10.0
libtpu: 0.0.40
codegen_flags: <defaults>
</compile_context>

<pallas_src>
import jax
import jax.numpy as jnp
from jax.experimental import pallas as pl
from jax.experimental.pallas import tpu as pltpu

EPS = 1e-5            # nn.BatchNorm1d default eps
NEG_SLOPE = 0.1       # LeakyReLU negative_slope
LANE = 128
BF16_ROWS = 16        # bf16 packs 16 rows per vreg (sublane packing)
VMEM_SCOPED_DEFAULT = 32 * 1024 * 1024
VMEM_CAP = 48 * 1024 * 1024   # stay under v7x's 64 MiB physical VMEM


def _round_up(x, m):
    return (x + m - 1) // m * m


def _pad2(a, rows, cols):
    return jnp.pad(a, ((0, rows - a.shape[0]), (0, cols - a.shape[1])))


def _leaky_relu(h):
    return jnp.where(h > 0, h, NEG_SLOPE * h)


def task_a_mlp_kernel(x_ref, w1_ref, b1_ref, w2_ref, b2_ref, w3_ref, b3_ref, o_ref):
    # x arrives in its native dtype; cast to bf16 for the MXU in-kernel (VPU cast hides
    # under MXU slack).  Accumulate in f32; bias add / LeakyReLU stay f32 (v5e VPU: no bf16).
    x = x_ref[...].astype(jnp.bfloat16)
    h = jnp.dot(x, w1_ref[...], preferred_element_type=jnp.float32) + b1_ref[...]
    h = _leaky_relu(h)
    # TODO(synk): Dropout(0.5) is identity in eval mode; training-mode stochastic masking
    # (pltpu.prng_*) intentionally not implemented.
    h = jnp.dot(h.astype(jnp.bfloat16), w2_ref[...],
                preferred_element_type=jnp.float32) + b2_ref[...]
    h = _leaky_relu(h)
    out = jnp.dot(h.astype(jnp.bfloat16), w3_ref[...],
                  preferred_element_type=jnp.float32) + b3_ref[...]
    o_ref[...] = out.astype(o_ref.dtype)


def prepare_params(params):
    """One-time preparation (hoisted out of the per-call path):
    fold BatchNorm1d (eval mode) + Linear bias into the Linear weights, pad the hidden
    feature dims to multiples of 128 lanes, cast weights to bf16.  The K dim of layer 1
    (d_in) and the N dim of layer 3 (d_out) are left UN-padded so x needs no column
    padding and the output writeback stays at its true width."""
    d_in, d0 = params["w1"].shape
    d1 = params["w2"].shape[1]
    d_out = params["w3"].shape[1]
    d0_p = _round_up(d0, LANE)
    d1_p = _round_up(d1, LANE)

    s1 = params["g1"] * jax.lax.rsqrt(params["v1"] + EPS)            # (1, d0)
    w1f = params["w1"] * s1
    b1f = (params["b1"] - params["m1"]) * s1 + params["be1"]
    s2 = params["g2"] * jax.lax.rsqrt(params["v2"] + EPS)            # (1, d1)
    w2f = params["w2"] * s2
    b2f = (params["b2"] - params["m2"]) * s2 + params["be2"]

    return dict(
        w1=_pad2(w1f, d_in, d0_p).astype(jnp.bfloat16),              # K un-padded
        b1=_pad2(b1f, 1, d0_p),                                      # biases stay f32
        w2=_pad2(w2f, d0_p, d1_p).astype(jnp.bfloat16),
        b2=_pad2(b2f, 1, d1_p),
        w3=_pad2(params["w3"], d1_p, d_out).astype(jnp.bfloat16),    # N un-padded
        b3=params["b3"],                                             # (1, d_out) f32
        dims=(int(d_in), int(d0_p), int(d1_p), int(d_out)),
    )


def _choose_tb(n):
    # 256-512 rows amortize the ~0.35us/step pipeline overhead and MXU weight pushes;
    # multiple of 16 (bf16 row packing); keep >= 2 grid blocks when N allows so
    # dimension_semantics=("parallel",) shards across v7x's 2 TensorCores.
    tb = _round_up(max(n // 2, 1), BF16_ROWS)
    return int(min(512, max(BF16_ROWS, tb)))


def task_a_predict_layer_h(x_nchw, prep, *, tb=None):
    """x_nchw: (N, C, H, W) with C*H*W == emb_size + extra.  prep: output of prepare_params."""
    d_in, d0_p, d1_p, d_out = prep["dims"]
    N = x_nchw.shape[0]
    x2d = x_nchw.reshape(N, -1)           # torch.flatten(x, 1) -- metadata only, no cast/pad
    assert x2d.shape[1] == d_in, (x2d.shape, d_in)

    if tb is None:
        tb = _choose_tb(N)
    tb = max(BF16_ROWS, _round_up(min(tb, max(N, 1)), BF16_ROWS))
    n_p = _round_up(N, tb)
    if n_p != N:
        x2d = jnp.pad(x2d, ((0, n_p - N), (0, 0)))
    grid = (n_p // tb,)

    w1, b1 = prep["w1"], prep["b1"]
    w2, b2 = prep["w2"], prep["b2"]
    w3, b3 = prep["w3"], prep["b3"]
    x_itemsize = jnp.dtype(x2d.dtype).itemsize

    flops = 2 * n_p * (d_in * d0_p + d0_p * d1_p + d1_p * d_out)
    bytes_accessed = (n_p * d_in * x_itemsize
                      + (w1.size + w2.size + w3.size) * 2
                      + (b1.size + b2.size + b3.size) * 4
                      + n_p * d_out * 4)

    # Per-step VMEM live set: double-buffered x/out tiles + resident weights + intermediates.
    vmem_est = int(1.5 * (2 * tb * d_in * x_itemsize + 2 * tb * d_out * 4
                          + (w1.size + w2.size + w3.size) * 2
                          + (b1.size + b2.size + b3.size) * 4
                          + tb * (d0_p + d1_p) * 4))
    ck = dict(dimension_semantics=("parallel",))
    if vmem_est > VMEM_SCOPED_DEFAULT:
        ck["vmem_limit_bytes"] = min(vmem_est, VMEM_CAP)

    def tile_spec(shape):
        return pl.BlockSpec(shape, lambda i: (i, 0))

    def const_spec(shape):
        return pl.BlockSpec(shape, lambda i: (0, 0))   # weights resident across batch tiles

    out_p = pl.pallas_call(
        task_a_mlp_kernel,
        out_shape=jax.ShapeDtypeStruct((n_p, d_out), jnp.float32),
        grid=grid,
        in_specs=[
            tile_spec((tb, d_in)),
            const_spec(w1.shape), const_spec(b1.shape),
            const_spec(w2.shape), const_spec(b2.shape),
            const_spec(w3.shape), const_spec(b3.shape),
        ],
        out_specs=tile_spec((tb, d_out)),
        compiler_params=pltpu.CompilerParams(**ck),
        cost_estimate=pl.CostEstimate(
            flops=flops, transcendentals=0, bytes_accessed=bytes_accessed),
    )(x2d, w1, b1, w2, b2, w3, b3)

    return out_p if n_p == N else out_p[:N]


def make_params(key, emb_size, in_size, extra, out_size):
    """Deterministic synthetic parameters, shapes per the PyTorch __init__."""
    ks = jax.random.split(key, 14)
    d_in = emb_size + extra
    d0, d1 = in_size

    def lin(kw, kb, fan_in, fan_out):
        scale = 1.0 / jnp.sqrt(fan_in)
        w = jax.random.uniform(kw, (fan_in, fan_out), jnp.float32, -scale, scale)
        b = jax.random.uniform(kb, (1, fan_out), jnp.float32, -scale, scale)
        return w, b

    w1, b1 = lin(ks[0], ks[1], d_in, d0)
    w2, b2 = lin(ks[2], ks[3], d0, d1)
    w3, b3 = lin(ks[4], ks[5], d1, out_size)

    # BatchNorm1d affine params + running stats (inference mode).
    g1 = 1.0 + 0.1 * jax.random.normal(ks[6], (1, d0), jnp.float32)
    be1 = 0.1 * jax.random.normal(ks[7], (1, d0), jnp.float32)
    m1 = 0.05 * jax.random.normal(ks[8], (1, d0), jnp.float32)
    v1 = 1.0 + 0.1 * jax.random.uniform(ks[9], (1, d0), jnp.float32)

    g2 = 1.0 + 0.1 * jax.random.normal(ks[10], (1, d1), jnp.float32)
    be2 = 0.1 * jax.random.normal(ks[11], (1, d1), jnp.float32)
    m2 = 0.05 * jax.random.normal(ks[12], (1, d1), jnp.float32)
    v2 = 1.0 + 0.1 * jax.random.uniform(ks[13], (1, d1), jnp.float32)

    return dict(w1=w1, b1=b1, g1=g1, be1=be1, m1=m1, v1=v1,
                w2=w2, b2=b2, g2=g2, be2=be2, m2=m2, v2=v2,
                w3=w3, b3=b3)


def reference_forward(x_nchw, p):
    """Pure-JAX reference mirroring the PyTorch forward (eval mode), full f32."""
    x = x_nchw.reshape(x_nchw.shape[0], -1).astype(jnp.float32)
    h = x @ p["w1"] + p["b1"]
    h = (h - p["m1"]) / jnp.sqrt(p["v1"] + EPS) * p["g1"] + p["be1"]
    h = jnp.where(h > 0, h, NEG_SLOPE * h)
    h = h @ p["w2"] + p["b2"]
    h = (h - p["m2"]) / jnp.sqrt(p["v2"] + EPS) * p["g2"] + p["be2"]
    h = jnp.where(h > 0, h, NEG_SLOPE * h)
    return h @ p["w3"] + p["b3"]


if __name__ == "__main__":
    # Small shapes consistent with the module: x (N, C, H, W) flattened to
    # emb_size + extra = C*H*W; in_size = (64, 48); out_size = 16.
    N, C, H, W = 16, 2, 4, 4
    emb_size, extra = 24, 8            # emb_size + extra == C*H*W == 32
    in_size = (64, 48)
    out_size = 16

    key = jax.random.PRNGKey(0)
    kx, kp = jax.random.split(key)
    x = jax.random.normal(kx, (N, C, H, W), jnp.float32)
    params = make_params(kp, emb_size, in_size, extra, out_size)

    prep = prepare_params(params)      # one-time: BN fold + pad + bf16 cast (off the hot path)
    out = task_a_predict_layer_h(x, prep)
    out = jax.block_until_ready(out)

    ref = reference_forward(x, params)
    assert out.shape == (N, out_size)
    # bf16 matmul operands (f32 accumulation) -> slightly relaxed tolerance.
    assert jnp.allclose(out, ref, atol=5e-2, rtol=5e-2), "mismatch vs reference"

    print("KERNEL_OK")
</pallas_src>

<mosaic_0001>
module attributes {stable_mosaic.version = 11 : i64} {
  func.func @task_a_mlp_kernel(%arg0: i32, %arg1: memref<16x32xf32, #tpu.memory_space<vmem>>, %arg2: memref<32x128xbf16, #tpu.memory_space<vmem>>, %arg3: memref<1x128xf32, #tpu.memory_space<vmem>>, %arg4: memref<128x128xbf16, #tpu.memory_space<vmem>>, %arg5: memref<1x128xf32, #tpu.memory_space<vmem>>, %arg6: memref<128x16xbf16, #tpu.memory_space<vmem>>, %arg7: memref<1x16xf32, #tpu.memory_space<vmem>>, %arg8: memref<16x16xf32, #tpu.memory_space<vmem>>) attributes {dimension_semantics = [#tpu.dimension_semantics<parallel>], iteration_bounds = array<i64: 1>, scalar_prefetch = 0 : i64, scratch_operands = 0 : i64, tpu.core_type = #tpu.core_type<tc>, window_params = [{transform_indices = @transform_0, window_bounds = array<i64: 16, 32>}, {pipeline_mode = #tpu.pipeline_mode<synchronous>, transform_indices = @transform_1, window_bounds = array<i64: 32, 128>}, {pipeline_mode = #tpu.pipeline_mode<synchronous>, transform_indices = @transform_2, window_bounds = array<i64: 1, 128>}, {pipeline_mode = #tpu.pipeline_mode<synchronous>, transform_indices = @transform_3, window_bounds = array<i64: 128, 128>}, {pipeline_mode = #tpu.pipeline_mode<synchronous>, transform_indices = @transform_4, window_bounds = array<i64: 1, 128>}, {pipeline_mode = #tpu.pipeline_mode<synchronous>, transform_indices = @transform_5, window_bounds = array<i64: 128, 16>}, {pipeline_mode = #tpu.pipeline_mode<synchronous>, transform_indices = @transform_6, window_bounds = array<i64: 1, 16>}, {transform_indices = @transform_7, window_bounds = array<i64: 16, 16>}]} {
    %c0 = arith.constant 0 : index
    %c0_0 = arith.constant 0 : index
    %0 = vector.load %arg1[%c0, %c0_0] : memref<16x32xf32, #tpu.memory_space<vmem>>, vector<16x32xf32>
    %1 = arith.truncf %0 : vector<16x32xf32> to vector<16x32xbf16>
    %c0_1 = arith.constant 0 : index
    %c0_2 = arith.constant 0 : index
    %2 = vector.load %arg2[%c0_1, %c0_2] : memref<32x128xbf16, #tpu.memory_space<vmem>>, vector<32x128xbf16>
    %cst = arith.constant dense<0.000000e+00> : vector<16x128xf32>
    %3 = tpu.matmul %1, %2, %cst {dimension_numbers = #tpu.dot_dimension_numbers<[1], [0], [0], [1], [0, 0, 1, 1], [], []>} : vector<16x32xbf16>, vector<32x128xbf16>, vector<16x128xf32> -> vector<16x128xf32>
    %c0_3 = arith.constant 0 : index
    %c0_4 = arith.constant 0 : index
    %4 = vector.load %arg3[%c0_3, %c0_4] : memref<1x128xf32, #tpu.memory_space<vmem>>, vector<1x128xf32>
    %5 = vector.broadcast %4 : vector<1x128xf32> to vector<16x128xf32>
    %6 = arith.addf %3, %5 : vector<16x128xf32>
    %cst_5 = arith.constant 0.000000e+00 : f32
    %7 = vector.broadcast %cst_5 : f32 to vector<16x128xf32>
    %8 = arith.cmpf ogt, %6, %7 : vector<16x128xf32>
    %cst_6 = arith.constant 1.000000e-01 : f32
    %9 = vector.broadcast %cst_6 : f32 to vector<16x128xf32>
    %10 = arith.mulf %9, %6 : vector<16x128xf32>
    %11 = arith.select %8, %6, %10 : vector<16x128xi1>, vector<16x128xf32>
    %12 = arith.truncf %11 : vector<16x128xf32> to vector<16x128xbf16>
    %c0_7 = arith.constant 0 : index
    %c0_8 = arith.constant 0 : index
    %13 = vector.load %arg4[%c0_7, %c0_8] : memref<128x128xbf16, #tpu.memory_space<vmem>>, vector<128x128xbf16>
    %cst_9 = arith.constant dense<0.000000e+00> : vector<16x128xf32>
    %14 = tpu.matmul %12, %13, %cst_9 {dimension_numbers = #tpu.dot_dimension_numbers<[1], [0], [0], [1], [0, 0, 1, 1], [], []>} : vector<16x128xbf16>, vector<128x128xbf16>, vector<16x128xf32> -> vector<16x128xf32>
    %c0_10 = arith.constant 0 : index
    %c0_11 = arith.constant 0 : index
    %15 = vector.load %arg5[%c0_10, %c0_11] : memref<1x128xf32, #tpu.memory_space<vmem>>, vector<1x128xf32>
    %16 = vector.broadcast %15 : vector<1x128xf32> to vector<16x128xf32>
    %17 = arith.addf %14, %16 : vector<16x128xf32>
    %cst_12 = arith.constant 0.000000e+00 : f32
    %18 = vector.broadcast %cst_12 : f32 to vector<16x128xf32>
    %19 = arith.cmpf ogt, %17, %18 : vector<16x128xf32>
    %cst_13 = arith.constant 1.000000e-01 : f32
    %20 = vector.broadcast %cst_13 : f32 to vector<16x128xf32>
    %21 = arith.mulf %20, %17 : vector<16x128xf32>
    %22 = arith.select %19, %17, %21 : vector<16x128xi1>, vector<16x128xf32>
    %23 = arith.truncf %22 : vector<16x128xf32> to vector<16x128xbf16>
    %c0_14 = arith.constant 0 : index
    %c0_15 = arith.constant 0 : index
    %24 = vector.load %arg6[%c0_14, %c0_15] : memref<128x16xbf16, #tpu.memory_space<vmem>>, vector<128x16xbf16>
    %cst_16 = arith.constant dense<0.000000e+00> : vector<16x16xf32>
    %25 = tpu.matmul %23, %24, %cst_16 {dimension_numbers = #tpu.dot_dimension_numbers<[1], [0], [0], [1], [0, 0, 1, 1], [], []>} : vector<16x128xbf16>, vector<128x16xbf16>, vector<16x16xf32> -> vector<16x16xf32>
    %c0_17 = arith.constant 0 : index
    %c0_18 = arith.constant 0 : index
    %26 = vector.load %arg7[%c0_17, %c0_18] : memref<1x16xf32, #tpu.memory_space<vmem>>, vector<1x16xf32>
    %27 = vector.broadcast %26 : vector<1x16xf32> to vector<16x16xf32>
    %28 = arith.addf %25, %27 : vector<16x16xf32>
    %c0_19 = arith.constant 0 : index
    %c0_20 = arith.constant 0 : index
    %29 = vector.load %arg8[%c0_19, %c0_20] : memref<16x16xf32, #tpu.memory_space<vmem>>, vector<16x16xf32>
    tpu.vector_store %arg8[%c0_19, %c0_20], %28 {strides = array<i32>} : memref<16x16xf32, #tpu.memory_space<vmem>>, vector<16x16xf32>,
    return
  }
  func.func @transform_0(%arg0: i32) -> (i32, i32) {
    %c0_i32 = arith.constant 0 : i32
    %c0_i32_0 = arith.constant 0 : i32
    return %arg0, %c0_i32 : i32, i32
  }
  func.func @transform_1(%arg0: i32) -> (i32, i32) {
    %c0_i32 = arith.constant 0 : i32
    %c0_i32_0 = arith.constant 0 : i32
    %c0_i32_1 = arith.constant 0 : i32
    return %c0_i32, %c0_i32_0 : i32, i32
  }
  func.func @transform_2(%arg0: i32) -> (i32, i32) {
    %c0_i32 = arith.constant 0 : i32
    %c0_i32_0 = arith.constant 0 : i32
    %c0_i32_1 = arith.constant 0 : i32
    return %c0_i32, %c0_i32_0 : i32, i32
  }
  func.func @transform_3(%arg0: i32) -> (i32, i32) {
    %c0_i32 = arith.constant 0 : i32
    %c0_i32_0 = arith.constant 0 : i32
    %c0_i32_1 = arith.constant 0 : i32
    return %c0_i32, %c0_i32_0 : i32, i32
  }
  func.func @transform_4(%arg0: i32) -> (i32, i32) {
    %c0_i32 = arith.constant 0 : i32
    %c0_i32_0 = arith.constant 0 : i32
    %c0_i32_1 = arith.constant 0 : i32
    return %c0_i32, %c0_i32_0 : i32, i32
  }
  func.func @transform_5(%arg0: i32) -> (i32, i32) {
    %c0_i32 = arith.constant 0 : i32
    %c0_i32_0 = arith.constant 0 : i32
    %c0_i32_1 = arith.constant 0 : i32
    return %c0_i32, %c0_i32_0 : i32, i32
  }
  func.func @transform_6(%arg0: i32) -> (i32, i32) {
    %c0_i32 = arith.constant 0 : i32
    %c0_i32_0 = arith.constant 0 : i32
    %c0_i32_1 = arith.constant 0 : i32
    return %c0_i32, %c0_i32_0 : i32, i32
  }
  func.func @transform_7(%arg0: i32) -> (i32, i32) {
    %c0_i32 = arith.constant 0 : i32
    %c0_i32_0 = arith.constant 0 : i32
    return %arg0, %c0_i32 : i32, i32
  }
}

</mosaic_0001>

<llo_original>
// kernel: tpu_custom_call.1
$region0: #{tpu_custom_call.1}
  #allocation0 [shape = 'u32[]', space=smem, size = 0x4, offset = 0x4, fixed_abs, tag = 'smem constant byte address 0x4 - core index']
  #allocation1 [shape = 'u32[72,128]{1,0:T(1,128)}', space=vmem, size = 0x9000, scoped, tag = 'internal scratch']
  %s0 = inlined_call_operand.hbm [shape: f32[16,32], index: 0, kind: input, shape index: {}]
  %s1 = inlined_call_operand.hbm [shape: bf16[32,128], index: 1, kind: input, shape index: {}]
  %s2 = inlined_call_operand.vmem [shape: f32[1,128], index: 2, kind: input, shape index: {}]
  %s3 = inlined_call_operand.vmem [shape: bf16[128,128], index: 3, kind: input, shape index: {}]
  %s4 = inlined_call_operand.vmem [shape: f32[1,128], index: 4, kind: input, shape index: {}]
  %s5 = inlined_call_operand.vmem [shape: bf16[128,16], index: 5, kind: input, shape index: {}]
  %s6 = inlined_call_operand.vmem [shape: f32[1,16], index: 6, kind: input, shape index: {}]
  %s7 = inlined_call_operand.hbm [shape: f32[16,16], index: 7, kind: output, shape index: {}]
  %s8 = sld [smem:[#allocation0]]
  $region46: #{tpu_custom_call.1} parent=0
    _
  %s10 = ssub.s32 1, %s8
  %s11 = scalar_select 0, %s10, %s8
  $region1: #{tpu_custom_call.1} parent=0
    #allocation2 [shape = 'u8[8192]{0}', space=vmem, size = 0x2000, scoped, tag = 'input window, operand 0, single buffered']
    #allocation3 [shape = 's32[1]{0}', space=sflag, size = 0x4, scoped, tag = 'scoped memory for tpu_custom_call.1']
    #allocation4 [shape = 's32[1]{0}', space=sflag, size = 0x4, scoped, tag = 'scoped memory for tpu_custom_call.1']
    #allocation5 [shape = 'u8[8192]{0}', space=vmem, size = 0x2000, scoped, tag = 'input window, operand 1, single buffered']
    #allocation6 [shape = 's32[1]{0}', space=sflag, size = 0x4, scoped, tag = 'scoped memory for tpu_custom_call.1']
    #allocation7 [shape = 'u8[8192]{0}', space=vmem, size = 0x2000, scoped, tag = 'output window, operand 0, single buffered']
    %12 = vsyncpa [#allocation3], 0
    %13 = vsyncpa [#allocation6], 0
    %14 = vsyncpa [#allocation4], 0
    // Predicated region
    $region2: #{tpu_custom_call.1} parent=1 // pred_check
      _
    $region3: #{tpu_custom_call.1} parent=1 // pred_check_branch
      %16 = sbr.rel (0) target = $region5
    $region4: #{tpu_custom_call.1} parent=1 // pred_region
      %18 = vsyncadd [#allocation3], 0
      %s19 = sshll.u32 %s0, 4
      %s20 = int_to_ptr.hbm [resolvable:$true] %s19
      %s21 = sshll.u32 [#allocation2], 4
      %s22 = int_to_ptr.vmem [resolvable:$true] %s21
      %27 = dma.hbm_to_vmem [thread:$0]  %s20, 256, %s22, [#allocation3], 128, 128, 8
    $region5: #{tpu_custom_call.1} parent=1 // pred_fallthru
      _
    // Predicated region
    $region6: #{tpu_custom_call.1} parent=1 // pred_check
      _
    $region7: #{tpu_custom_call.1} parent=1 // pred_check_branch
      %29 = sbr.rel (0) target = $region9
    $region8: #{tpu_custom_call.1} parent=1 // pred_region
      %31 = vsyncadd [#allocation6], 0
      %s32 = sshll.u32 %s1, 4
      %s33 = int_to_ptr.hbm [resolvable:$true] %s32
      %s34 = sshll.u32 [#allocation5], 4
      %s35 = int_to_ptr.vmem [resolvable:$true] %s34
      %40 = dma.hbm_to_vmem [thread:$0]  %s33, 256, %s35, [#allocation6], 64, 64, 4
    $region9: #{tpu_custom_call.1} parent=1 // pred_fallthru
      _
    // Predicated region
    $region10: #{tpu_custom_call.1} parent=1 // pred_check
      _
    $region11: #{tpu_custom_call.1} parent=1 // pred_check_branch
      %42 = sbr.rel (0) target = $region13
    $region12: #{tpu_custom_call.1} parent=1 // pred_region
      _
    $region13: #{tpu_custom_call.1} parent=1 // pred_fallthru
      _
    // Predicated region
    $region14: #{tpu_custom_call.1} parent=1 // pred_check
      _
    $region15: #{tpu_custom_call.1} parent=1 // pred_check_branch
      %44 = sbr.rel (0) target = $region17
    $region16: #{tpu_custom_call.1} parent=1 // pred_region
      _
    $region17: #{tpu_custom_call.1} parent=1 // pred_fallthru
      _
    // Predicated region
    $region18: #{tpu_custom_call.1} parent=1 // pred_check
      _
    $region19: #{tpu_custom_call.1} parent=1 // pred_check_branch
      %46 = sbr.rel (0) target = $region21
    $region20: #{tpu_custom_call.1} parent=1 // pred_region
      _
    $region21: #{tpu_custom_call.1} parent=1 // pred_fallthru
      _
    // Predicated region
    $region22: #{tpu_custom_call.1} parent=1 // pred_check
      _
    $region23: #{tpu_custom_call.1} parent=1 // pred_check_branch
      %48 = sbr.rel (0) target = $region25
    $region24: #{tpu_custom_call.1} parent=1 // pred_region
      _
    $region25: #{tpu_custom_call.1} parent=1 // pred_fallthru
      _
    // Predicated region
    $region26: #{tpu_custom_call.1} parent=1 // pred_check
      _
    $region27: #{tpu_custom_call.1} parent=1 // pred_check_branch
      %50 = sbr.rel (0) target = $region29
    $region28: #{tpu_custom_call.1} parent=1 // pred_region
      _
    $region29: #{tpu_custom_call.1} parent=1 // pred_fallthru
      _
    // Predicated region
    $region30: #{tpu_custom_call.1} parent=1 // pred_check
      _
    $region31: #{tpu_custom_call.1} parent=1 // pred_check_branch
      %52 = sbr.rel (0) target = $region33
    $region32: #{tpu_custom_call.1} parent=1 // pred_region
      %54 = dma.done [#allocation3], 256
    $region33: #{tpu_custom_call.1} parent=1 // pred_fallthru
      _
    // Predicated region
    $region34: #{tpu_custom_call.1} parent=1 // pred_check
      _
    $region35: #{tpu_custom_call.1} parent=1 // pred_check_branch
      %56 = sbr.rel (0) target = $region37
    $region36: #{tpu_custom_call.1} parent=1 // pred_region
      %58 = dma.done [#allocation6], 256
    $region37: #{tpu_custom_call.1} parent=1 // pred_fallthru
      _
    %v60 = vld [vmem:[#allocation2] sm:$0xff]
    %v61 = vld [vmem:[#allocation2 + $0x8] sm:$0xff]
    %v62 = vpack.c.bf16 %v61, %v60
    %v63 = vld [vmem:[#allocation5] sm:$0xf]
    %v64 = vld [vmem:[#allocation5 + $0x4] sm:$0xf]
    %v65 = vld [vmem:[#allocation5 + $0x8] sm:$0xf]
    %v66 = vld [vmem:[#allocation5 + $0xc] sm:$0xf]
    %v67 = vld [vmem:[%s2] sm:$0x1]
    %v69 = vperm.slane %v67, 0
    %v75 = vunpack.c.l.b16 %v63
    %v76 = vunpack.c.l.b16 %v64
    %v77 = vunpack.c.l.b16 %v65
    %v78 = vunpack.c.l.b16 %v66
    %v79 = vpack.c.b16 %v76, %v75
    %v80 = vpack.c.b16 %v78, %v77
    %vm83 = vcmask 261120
    %v85 = vsel %vm83, %v62, 0
    %87 = vmatpush.bf16.msra.mxu0 0
    %88 = vmatpush.bf16.msra.mxu0 0
    %89 = vmatpush.bf16.msra.mxu0 0
    %90 = vmatpush.bf16.msra.mxu0 0
    %91 = vmatpush.bf16.msra.mxu0 0
    %92 = vmatpush.bf16.msra.mxu0 0
    %93 = vmatpush.bf16.msra.mxu0 %v80
    %94 = vmatpush.bf16.msra.mxu0 %v79
    %95 = vmatmul.bf16.gmra.mxu0 %v85
    %v96 = vpop.f32.mrf.mxu0
    %v97 = vadd.f32 %v69, %v96
    %v98 = vpop.f32.mrf.mxu0
    %v99 = vadd.f32 %v69, %v98
    %100 = vdwg.mxu0
    %vm101 = vcmp.gt.f32.partialorder %v97, 0.0
    %vm102 = vcmp.gt.f32.partialorder %v99, 0.0
    %v103 = vmul.f32 %v97, 0.1
    %v104 = vmul.f32 %v99, 0.1
    %v105 = vsel %vm101, %v97, %v103
    %v106 = vsel %vm102, %v99, %v104
    %v107 = vpack.c.bf16 %v106, %v105
    %v108 = vld [vmem:[%s3] sm:$0xf]
    %v109 = vld [vmem:[%s3 + $0x4] sm:$0xf]
    %v110 = vld [vmem:[%s3 + $0x8] sm:$0xf]
    %v111 = vld [vmem:[%s3 + $0xc] sm:$0xf]
    %v112 = vld [vmem:[%s3 + $0x10] sm:$0xf]
    %v113 = vld [vmem:[%s3 + $0x14] sm:$0xf]
    %v114 = vld [vmem:[%s3 + $0x18] sm:$0xf]
    %v115 = vld [vmem:[%s3 + $0x1c] sm:$0xf]
    %v116 = vld [vmem:[%s3 + $0x20] sm:$0xf]
    %v117 = vld [vmem:[%s3 + $0x24] sm:$0xf]
    %v118 = vld [vmem:[%s3 + $0x28] sm:$0xf]
    %v119 = vld [vmem:[%s3 + $0x2c] sm:$0xf]
    %v120 = vld [vmem:[%s3 + $0x30] sm:$0xf]
    %v121 = vld [vmem:[%s3 + $0x34] sm:$0xf]
    %v122 = vld [vmem:[%s3 + $0x38] sm:$0xf]
    %v123 = vld [vmem:[%s3 + $0x3c] sm:$0xf]
    %v124 = vld [vmem:[%s4] sm:$0x1]
    %v126 = vperm.slane %v124, 0
    %v144 = vunpack.c.l.b16 %v108
    %v145 = vunpack.c.l.b16 %v109
    %v146 = vunpack.c.l.b16 %v110
    %v147 = vunpack.c.l.b16 %v111
    %v148 = vunpack.c.l.b16 %v112
    %v149 = vunpack.c.l.b16 %v113
    %v150 = vunpack.c.l.b16 %v114
    %v151 = vunpack.c.l.b16 %v115
    %v152 = vunpack.c.l.b16 %v116
    %v153 = vunpack.c.l.b16 %v117
    %v154 = vunpack.c.l.b16 %v118
    %v155 = vunpack.c.l.b16 %v119
    %v156 = vunpack.c.l.b16 %v120
    %v157 = vunpack.c.l.b16 %v121
    %v158 = vunpack.c.l.b16 %v122
    %v159 = vunpack.c.l.b16 %v123
    %v160 = vpack.c.b16 %v145, %v144
    %v161 = vpack.c.b16 %v147, %v146
    %v162 = vpack.c.b16 %v149, %v148
    %v163 = vpack.c.b16 %v151, %v150
    %v164 = vpack.c.b16 %v153, %v152
    %v165 = vpack.c.b16 %v155, %v154
    %v166 = vpack.c.b16 %v157, %v156
    %v167 = vpack.c.b16 %v159, %v158
    %176 = vmatpush.bf16.msra.mxu0 %v167
    %177 = vmatpush.bf16.msra.mxu0 %v166
    %178 = vmatpush.bf16.msra.mxu0 %v165
    %179 = vmatpush.bf16.msra.mxu0 %v164
    %180 = vmatpush.bf16.msra.mxu0 %v163
    %181 = vmatpush.bf16.msra.mxu0 %v162
    %182 = vmatpush.bf16.msra.mxu0 %v161
    %183 = vmatpush.bf16.msra.mxu0 %v160
    %184 = vmatmul.bf16.gmra.mxu0 %v107
    %v185 = vpop.f32.mrf.mxu0
    %v186 = vadd.f32 %v126, %v185
    %v187 = vpop.f32.mrf.mxu0
    %v188 = vadd.f32 %v126, %v187
    %189 = vdwg.mxu0
    %vm190 = vcmp.gt.f32.partialorder %v186, 0.0
    %vm191 = vcmp.gt.f32.partialorder %v188, 0.0
    %v192 = vmul.f32 %v186, 0.1
    %v193 = vmul.f32 %v188, 0.1
    %v194 = vsel %vm190, %v186, %v192
    %v195 = vsel %vm191, %v188, %v193
    %v196 = vpack.c.bf16 %v195, %v194
    %v197 = vld [vmem:[%s5] sm:$0xf]
    %v198 = vld [vmem:[%s5 + $0x4] sm:$0xf]
    %v199 = vld [vmem:[%s5 + $0x8] sm:$0xf]
    %v200 = vld [vmem:[%s5 + $0xc] sm:$0xf]
    %v201 = vld [vmem:[%s5 + $0x10] sm:$0xf]
    %v202 = vld [vmem:[%s5 + $0x14] sm:$0xf]
    %v203 = vld [vmem:[%s5 + $0x18] sm:$0xf]
    %v204 = vld [vmem:[%s5 + $0x1c] sm:$0xf]
    %v205 = vld [vmem:[%s5 + $0x20] sm:$0xf]
    %v206 = vld [vmem:[%s5 + $0x24] sm:$0xf]
    %v207 = vld [vmem:[%s5 + $0x28] sm:$0xf]
    %v208 = vld [vmem:[%s5 + $0x2c] sm:$0xf]
    %v209 = vld [vmem:[%s5 + $0x30] sm:$0xf]
    %v210 = vld [vmem:[%s5 + $0x34] sm:$0xf]
    %v211 = vld [vmem:[%s5 + $0x38] sm:$0xf]
    %v212 = vld [vmem:[%s5 + $0x3c] sm:$0xf]
    %v213 = vld [vmem:[%s6] sm:$0x1]
    %v215 = vperm.slane %v213, 0
    %v233 = vunpack.c.l.b16 %v197
    %v234 = vunpack.c.l.b16 %v198
    %v235 = vunpack.c.l.b16 %v199
    %v236 = vunpack.c.l.b16 %v200
    %v237 = vunpack.c.l.b16 %v201
    %v238 = vunpack.c.l.b16 %v202
    %v239 = vunpack.c.l.b16 %v203
    %v240 = vunpack.c.l.b16 %v204
    %v241 = vunpack.c.l.b16 %v205
    %v242 = vunpack.c.l.b16 %v206
    %v243 = vunpack.c.l.b16 %v207
    %v244 = vunpack.c.l.b16 %v208
    %v245 = vunpack.c.l.b16 %v209
    %v246 = vunpack.c.l.b16 %v210
    %v247 = vunpack.c.l.b16 %v211
    %v248 = vunpack.c.l.b16 %v212
    %v249 = vpack.c.b16 %v234, %v233
    %v250 = vpack.c.b16 %v236, %v235
    %v251 = vpack.c.b16 %v238, %v237
    %v252 = vpack.c.b16 %v240, %v239
    %v253 = vpack.c.b16 %v242, %v241
    %v254 = vpack.c.b16 %v244, %v243
    %v255 = vpack.c.b16 %v246, %v245
    %v256 = vpack.c.b16 %v248, %v247
    %265 = vmatpush.bf16.msra.mxu0 %v256
    %266 = vmatpush.bf16.msra.mxu0 %v255
    %267 = vmatpush.bf16.msra.mxu0 %v254
    %268 = vmatpush.bf16.msra.mxu0 %v253
    %269 = vmatpush.bf16.msra.mxu0 %v252
    %270 = vmatpush.bf16.msra.mxu0 %v251
    %271 = vmatpush.bf16.msra.mxu0 %v250
    %272 = vmatpush.bf16.msra.mxu0 %v249
    %273 = vmatmul.bf16.gmra.mxu0 %v196
    %v274 = vpop.f32.mrf.mxu0
    %v275 = vadd.f32 %v215, %v274
    %v276 = vpop.f32.mrf.mxu0
    %v277 = vadd.f32 %v215, %v276
    %278 = vdwg.mxu0
    %vm279 = vcmask 130048
    %280 = vst.msk [vmem:[#allocation7] sm:$0xff] %vm279, %v275
    %281 = vst.msk [vmem:[#allocation7 + $0x8] sm:$0xff] %vm279, %v277
    // Predicated region
    $region38: #{tpu_custom_call.1} parent=1 // pred_check
      _
    $region39: #{tpu_custom_call.1} parent=1 // pred_check_branch
      %283 = sbr.rel (0) target = $region41
    $region40: #{tpu_custom_call.1} parent=1 // pred_region
      %285 = vsyncadd [#allocation4], 0
      %s286 = sshll.u32 [#allocation7], 4
      %s287 = int_to_ptr.vmem [resolvable:$true] %s286
      %s288 = sshll.u32 %s7, 4
      %s289 = int_to_ptr.hbm [resolvable:$true] %s288
      %294 = dma.vmem_to_hbm [thread:$0]  %s287, 256, %s289, [#allocation4], 128, 128, 8
    $region41: #{tpu_custom_call.1} parent=1 // pred_fallthru
      _
    // Predicated region
    $region42: #{tpu_custom_call.1} parent=1 // pred_check
      _
    $region43: #{tpu_custom_call.1} parent=1 // pred_check_branch
      %296 = sbr.rel (0) target = $region45
    $region44: #{tpu_custom_call.1} parent=1 // pred_region
      %298 = dma.done [#allocation4], 256
    $region45: #{tpu_custom_call.1} parent=1 // pred_fallthru
      _
    %299 = vsyncpa [#allocation3], 1
    %300 = vsyncpa [#allocation6], 1
    %301 = vsyncpa [#allocation4], 1

</llo_original>
